<compile_context>
chip_gen: v7x
topology: tpu7x:2x2x1
jax: 0.10.0
libtpu: 0.0.40
codegen_flags: <defaults>
</compile_context>

<pallas_src>
import functools

import jax
import jax.numpy as jnp
from jax.experimental import pallas as pl
from jax.experimental.pallas import tpu as pltpu


# -----------------------------------------------------------------------------
# Kernels
# -----------------------------------------------------------------------------
def _repeat_kernel(x_ref, o_ref, *, n_repeat: int):
    """Path A: read (tR, D), write (tR, n_repeat*D) in one dense lane-contiguous store."""
    o_ref[...] = jnp.tile(x_ref[...], (1, n_repeat))


def _copy_kernel(x_ref, o_ref):
    """Path B: input block resident across the innermost repeat axis; plain copy."""
    o_ref[...] = x_ref[...]


# -----------------------------------------------------------------------------
# Tiling helpers
# -----------------------------------------------------------------------------
def _vmem_budget_and_limit(block_budget_bytes, vmem_limit_bytes):
    """Chip-generation-aware block budget (double-buffered in+out) and scoped limit."""
    try:
        cap = int(pltpu.get_tpu_info().vmem_capacity_bytes)
    except Exception:  # pragma: no cover - conservative fallback (v7x-sized)
        cap = 64 * 1024 * 1024
    if block_budget_bytes is None:
        # ~25% of physical VMEM for the (double-buffered) in+out blocks:
        # 16 MiB on v7x (64 MiB), 32 MiB on v5e/v6e (128 MiB).
        block_budget_bytes = cap // 4
    if vmem_limit_bytes is None:
        vmem_limit_bytes = min(cap // 2, 96 * 1024 * 1024)
    return block_budget_bytes, vmem_limit_bytes


def _sublane_multiple(itemsize: int) -> int:
    # f32: 8, bf16: 16, int8/fp8: 32.
    return max(8, 32 // max(itemsize, 1))


def _pick_rows_repeat_path(N, D, n_repeat, itemsize, budget, sublane):
    """Largest legal row tile for path A; 0 if even a sublane-height tile is too wide."""
    bytes_per_row = 2 * (1 + n_repeat) * D * itemsize  # double-buffered in + out
    tR = budget // max(bytes_per_row, 1)
    tR = (tR // sublane) * sublane
    if tR <= 0:
        return 0
    return min(tR, N)


def _pick_tiles_copy_path(N, D, itemsize, budget, sublane):
    """(tR, tD) for path B. tD is a multiple-of-128 divisor of D; tR a sublane multiple."""
    # Largest 128-multiple divisor of D whose double-buffered in+out blocks fit the
    # budget even at sublane height (feature-dim tiling instead of tiny row tiles).
    best_td = 128
    td = 128
    while td <= D:
        if D % td == 0 and 4 * sublane * td * itemsize <= budget:
            best_td = td
        td += 128
    tD = best_td
    tR = budget // max(4 * tD * itemsize, 1)  # in + out, double buffered
    tR = (tR // sublane) * sublane
    if tR <= 0:
        tR = sublane
    return min(tR, N), tD


# -----------------------------------------------------------------------------
# Public wrapper
# -----------------------------------------------------------------------------
def time_repeat(x: jax.Array, n_repeat: int = 1, n_expand: int = 0, *,
                block_budget_bytes: int | None = None,
                vmem_limit_bytes: int | None = None) -> jax.Array:
    """JAX/Pallas equivalent of TimeRepeat.forward on a (batch, seq, features) tensor."""
    assert n_repeat > 0, "n_repeat needs to be an integer > 0"
    assert isinstance(n_expand, int), "n_zeros needs to be an integer"
    # n_expand accepted for API parity; it has no effect on the returned value in
    # the reference PyTorch forward (dead code there).

    if n_repeat == 1:
        # Identity: avoid a full read+write HBM round trip.
        return x

    B, S, D = x.shape
    itemsize = jnp.dtype(x.dtype).itemsize

    if D % 128 != 0:
        # Lane-misaligned / narrow feature dim: a Pallas store would be masked
        # vst.msk partial stores (worst on v5e's single store slot). Let XLA do the
        # tile (and fuse it into consumers when used in-graph).
        return jnp.tile(x, (1, 1, n_repeat))

    N = B * S
    xf = x.reshape(N, D)  # free contiguous reshape; uniform large row tiles
    budget, limit = _vmem_budget_and_limit(block_budget_bytes, vmem_limit_bytes)
    sublane = _sublane_multiple(itemsize)
    bytes_accessed = (1 + n_repeat) * N * D * itemsize
    cost = pl.CostEstimate(flops=0, transcendentals=0, bytes_accessed=bytes_accessed)

    tR_a = _pick_rows_repeat_path(N, D, n_repeat, itemsize, budget, sublane)
    # Path B when rows are too wide for path A, or when n_repeat is large and D is
    # wide enough for efficient per-column output DMAs (keeps VMEM per step ~2x
    # instead of (1+n_repeat)x and skips building the n_repeat-wide vreg slab).
    use_copy_path = (tR_a == 0) or (n_repeat >= 4 and D * itemsize >= 512)

    if not use_copy_path:
        out = pl.pallas_call(
            functools.partial(_repeat_kernel, n_repeat=n_repeat),
            out_shape=jax.ShapeDtypeStruct((N, n_repeat * D), x.dtype),
            grid=(pl.cdiv(N, tR_a),),
            in_specs=[pl.BlockSpec((tR_a, D), lambda i: (i, 0))],
            out_specs=pl.BlockSpec((tR_a, n_repeat * D), lambda i: (i, 0)),
            compiler_params=pltpu.CompilerParams(
                dimension_semantics=("parallel",),
                vmem_limit_bytes=limit,
            ),
            cost_estimate=cost,
        )(xf)
    else:
        tR_b, tD = _pick_tiles_copy_path(N, D, itemsize, budget, sublane)
        nd = D // tD
        out = pl.pallas_call(
            _copy_kernel,
            out_shape=jax.ShapeDtypeStruct((N, n_repeat * D), x.dtype),
            # Repeat axis innermost: input block index is constant along it, so the
            # input tile stays resident in VMEM (no re-fetch) across the n_repeat
            # output stores.
            grid=(pl.cdiv(N, tR_b), nd, n_repeat),
            in_specs=[pl.BlockSpec((tR_b, tD), lambda i, d, r: (i, d))],
            out_specs=pl.BlockSpec((tR_b, tD),
                                   lambda i, d, r, nd=nd: (i, r * nd + d)),
            compiler_params=pltpu.CompilerParams(
                dimension_semantics=("parallel", "parallel", "arbitrary"),
                vmem_limit_bytes=limit,
            ),
            cost_estimate=cost,
        )(xf)

    return out.reshape(B, S, n_repeat * D)


# -----------------------------------------------------------------------------
# Self-test
# -----------------------------------------------------------------------------
if __name__ == "__main__":
    key = jax.random.PRNGKey(0)

    # Module-spec shapes: (batch, seq, input). D=32 is lane-misaligned -> XLA tile path.
    B, S, D = 2, 8, 32
    n_repeat, n_expand = 3, 2  # n_expand is dead code in the reference forward
    x = jax.random.normal(key, (B, S, D), dtype=jnp.float32)
    out = jax.block_until_ready(time_repeat(x, n_repeat=n_repeat, n_expand=n_expand))
    assert out.shape == (B, S, n_repeat * D), out.shape
    assert out.dtype == x.dtype
    assert jnp.array_equal(out, jnp.tile(x, (1, 1, n_repeat)))

    # Identity (n_repeat == 1): wrapper short-circuit.
    assert jnp.array_equal(jax.block_until_ready(time_repeat(x, n_repeat=1)), x)

    # Pallas path A (lane-dense D, single row tile).
    x2 = jax.random.normal(jax.random.PRNGKey(0), (2, 32, 128), dtype=jnp.float32)
    out2 = jax.block_until_ready(time_repeat(x2, n_repeat=2))
    assert jnp.array_equal(out2, jnp.tile(x2, (1, 1, 2)))

    # Pallas path A, multiple row tiles (tiny budget forces tR < N).
    out3 = jax.block_until_ready(
        time_repeat(x2, n_repeat=2, block_budget_bytes=32 * 1024))
    assert jnp.array_equal(out3, jnp.tile(x2, (1, 1, 2)))

    # Pallas path B (large n_repeat -> resident-input copy, per-repeat column blocks).
    out4 = jax.block_until_ready(time_repeat(x2, n_repeat=4))
    assert jnp.array_equal(out4, jnp.tile(x2, (1, 1, 4)))

    # Pallas path B forced by a very small budget (rows too wide for path A).
    out5 = jax.block_until_ready(
        time_repeat(x2, n_repeat=3, block_budget_bytes=2048))
    assert jnp.array_equal(out5, jnp.tile(x2, (1, 1, 3)))

    # Packed dtype (bf16: sublane multiple 16), path A.
    x6 = jax.random.normal(jax.random.PRNGKey(1), (2, 16, 128), dtype=jnp.bfloat16)
    out6 = jax.block_until_ready(time_repeat(x6, n_repeat=2))
    assert jnp.array_equal(out6, jnp.tile(x6, (1, 1, 2)))

    print("KERNEL_OK")
</pallas_src>

<mosaic_0001>
module attributes {stable_mosaic.version = 11 : i64} {
  func.func @_repeat_kernel(%arg0: i32, %arg1: memref<64x128xf32, #tpu.memory_space<vmem>>, %arg2: memref<64x256xf32, #tpu.memory_space<vmem>>) attributes {dimension_semantics = [#tpu.dimension_semantics<parallel>], iteration_bounds = array<i64: 1>, scalar_prefetch = 0 : i64, scratch_operands = 0 : i64, tpu.core_type = #tpu.core_type<tc>, window_params = [{transform_indices = @transform_0, window_bounds = array<i64: 64, 128>}, {transform_indices = @transform_1, window_bounds = array<i64: 64, 256>}]} {
    %c0 = arith.constant 0 : index
    %c0_0 = arith.constant 0 : index
    %0 = vector.load %arg1[%c0, %c0_0] : memref<64x128xf32, #tpu.memory_space<vmem>>, vector<64x128xf32>
    %1 = tpu.concatenate %0, %0 in 1 : vector<64x128xf32>, vector<64x128xf32> -> vector<64x256xf32>
    %c0_1 = arith.constant 0 : index
    %c0_2 = arith.constant 0 : index
    %2 = vector.load %arg2[%c0_1, %c0_2] : memref<64x256xf32, #tpu.memory_space<vmem>>, vector<64x256xf32>
    tpu.vector_store %arg2[%c0_1, %c0_2], %1 {strides = array<i32>} : memref<64x256xf32, #tpu.memory_space<vmem>>, vector<64x256xf32>,
    return
  }
  func.func @transform_0(%arg0: i32) -> (i32, i32) {
    %c0_i32 = arith.constant 0 : i32
    %c0_i32_0 = arith.constant 0 : i32
    return %arg0, %c0_i32 : i32, i32
  }
  func.func @transform_1(%arg0: i32) -> (i32, i32) {
    %c0_i32 = arith.constant 0 : i32
    %c0_i32_0 = arith.constant 0 : i32
    return %arg0, %c0_i32 : i32, i32
  }
}

</mosaic_0001>

<llo_original>
// kernel: tpu_custom_call.1
$region0: #{tpu_custom_call.1}
  #allocation0 [shape = 'u32[]', space=smem, size = 0x4, offset = 0x4, fixed_abs, tag = 'smem constant byte address 0x4 - core index']
  #allocation1 [shape = 'u32[144,128]{1,0:T(1,128)}', space=vmem, size = 0x12000, scoped, tag = 'internal scratch']
  %s0 = inlined_call_operand.hbm [shape: f32[64,128], index: 0, kind: input, shape index: {}]
  %s1 = inlined_call_operand.hbm [shape: f32[64,256], index: 1, kind: output, shape index: {}]
  %s2 = sld [smem:[#allocation0]]
  $region18: #{tpu_custom_call.1} parent=0
    _
  %s4 = ssub.s32 1, %s2
  %s5 = scalar_select 0, %s4, %s2
  $region1: #{tpu_custom_call.1} parent=0
    #allocation2 [shape = 'u8[32768]{0}', space=vmem, size = 0x8000, scoped, tag = 'input window, operand 0, single buffered']
    #allocation3 [shape = 's32[1]{0}', space=sflag, size = 0x4, scoped, tag = 'scoped memory for tpu_custom_call.1']
    #allocation4 [shape = 's32[1]{0}', space=sflag, size = 0x4, scoped, tag = 'scoped memory for tpu_custom_call.1']
    #allocation5 [shape = 'u8[65536]{0}', space=vmem, size = 0x10000, scoped, tag = 'output window, operand 0, single buffered']
    %6 = vsyncpa [#allocation3], 0
    %7 = vsyncpa [#allocation4], 0
    // Predicated region
    $region2: #{tpu_custom_call.1} parent=1 // pred_check
      _
    $region3: #{tpu_custom_call.1} parent=1 // pred_check_branch
      %9 = sbr.rel (0) target = $region5
    $region4: #{tpu_custom_call.1} parent=1 // pred_region
      %s11 = ssub.s32 1024, 1024
      %12 = vsyncadd [#allocation3], %s11
      %s13 = sshll.u32 [#allocation2], 4
      %s14 = int_to_ptr.vmem [resolvable:$true] %s13
      %19 = dma.hbm_to_vmem [thread:$0]  %s0, 1024, %s14, [#allocation3], 128, 128, 8
    $region5: #{tpu_custom_call.1} parent=1 // pred_fallthru
      _
    // Predicated region
    $region6: #{tpu_custom_call.1} parent=1 // pred_check
      _
    $region7: #{tpu_custom_call.1} parent=1 // pred_check_branch
      %21 = sbr.rel (0) target = $region9
    $region8: #{tpu_custom_call.1} parent=1 // pred_region
      %22 = dma.done [#allocation3], 1024
    $region9: #{tpu_custom_call.1} parent=1 // pred_fallthru
      _
    %v23 = vld [vmem:[#allocation2] sm:$0xff]
    %v24 = vld [vmem:[#allocation2 + $0x8] sm:$0xff]
    %v25 = vld [vmem:[#allocation2 + $0x10] sm:$0xff]
    %v26 = vld [vmem:[#allocation2 + $0x18] sm:$0xff]
    %v27 = vld [vmem:[#allocation2 + $0x20] sm:$0xff]
    %v28 = vld [vmem:[#allocation2 + $0x28] sm:$0xff]
    %v29 = vld [vmem:[#allocation2 + $0x30] sm:$0xff]
    %v30 = vld [vmem:[#allocation2 + $0x38] sm:$0xff]
    %31 = vst [vmem:[#allocation5] sm:$0xff] %v23
    %32 = vst [vmem:[#allocation5 + $0x8] sm:$0xff] %v23
    %33 = vst [vmem:[#allocation5 + $0x10] sm:$0xff] %v24
    %34 = vst [vmem:[#allocation5 + $0x18] sm:$0xff] %v24
    %35 = vst [vmem:[#allocation5 + $0x20] sm:$0xff] %v25
    %36 = vst [vmem:[#allocation5 + $0x28] sm:$0xff] %v25
    %37 = vst [vmem:[#allocation5 + $0x30] sm:$0xff] %v26
    %38 = vst [vmem:[#allocation5 + $0x38] sm:$0xff] %v26
    %39 = vst [vmem:[#allocation5 + $0x40] sm:$0xff] %v27
    %40 = vst [vmem:[#allocation5 + $0x48] sm:$0xff] %v27
    %41 = vst [vmem:[#allocation5 + $0x50] sm:$0xff] %v28
    %42 = vst [vmem:[#allocation5 + $0x58] sm:$0xff] %v28
    %43 = vst [vmem:[#allocation5 + $0x60] sm:$0xff] %v29
    %44 = vst [vmem:[#allocation5 + $0x68] sm:$0xff] %v29
    %45 = vst [vmem:[#allocation5 + $0x70] sm:$0xff] %v30
    %46 = vst [vmem:[#allocation5 + $0x78] sm:$0xff] %v30
    // Predicated region
    $region10: #{tpu_custom_call.1} parent=1 // pred_check
      _
    $region11: #{tpu_custom_call.1} parent=1 // pred_check_branch
      %48 = sbr.rel (0) target = $region13
    $region12: #{tpu_custom_call.1} parent=1 // pred_region
      %s50 = ssub.s32 2048, 2048
      %51 = vsyncadd [#allocation4], %s50
      %s52 = sshll.u32 [#allocation5], 4
      %s53 = int_to_ptr.vmem [resolvable:$true] %s52
      %58 = dma.vmem_to_hbm [thread:$0]  %s53, 2048, %s1, [#allocation4], 256, 256, 16
    $region13: #{tpu_custom_call.1} parent=1 // pred_fallthru
      _
    // Predicated region
    $region14: #{tpu_custom_call.1} parent=1 // pred_check
      _
    $region15: #{tpu_custom_call.1} parent=1 // pred_check_branch
      %60 = sbr.rel (0) target = $region17
    $region16: #{tpu_custom_call.1} parent=1 // pred_region
      %61 = dma.done [#allocation4], 2048
    $region17: #{tpu_custom_call.1} parent=1 // pred_fallthru
      _
    %62 = vsyncpa [#allocation3], 1
    %63 = vsyncpa [#allocation4], 1

</llo_original>
